<compile_context>
chip_gen: v7x
topology: tpu7x:2x2x1
jax: 0.10.0
libtpu: 0.0.40
codegen_flags: <defaults>
</compile_context>

<pallas_src>
import jax
import jax.numpy as jnp
from jax.experimental import pallas as pl
from jax.experimental.pallas import tpu as pltpu


def _linear_kernel(x_ref, w_ref, b_ref, o_ref):
    # x_ref: (TM, H) VMEM tile (streamed), w_ref: (1, H) VMEM (grid-invariant),
    # b_ref: (1, 1) f32 SMEM scalar, o_ref: (TM, 1) VMEM tile.
    x = x_ref[...].astype(jnp.float32)   # no-op for f32 inputs
    w = w_ref[...].astype(jnp.float32)   # (1, H) -> broadcasts over rows
    # VPU elementwise multiply + XLU lane reduction; f32 accumulation.
    acc = jnp.sum(x * w, axis=-1, keepdims=True)       # (TM, 1)
    o_ref[...] = (acc + b_ref[0, 0]).astype(o_ref.dtype)


def _vmem_limit_bytes():
    """Generation-aware scoped-VMEM limit: 64 MiB on v5e/v6e (128 MiB physical),
    32 MiB on v7x (64 MiB physical) or if the hardware query is unavailable."""
    try:
        cap = pltpu.get_tpu_info().vmem_capacity_bytes
    except Exception:
        cap = 0
    if cap >= 100 * 1024 * 1024:
        return 64 * 1024 * 1024
    return 32 * 1024 * 1024


def _choose_tm(M, H, itemsize, vmem_limit):
    """Pick the row-tile TM.

    Budget: double-buffered x block (TM*H*itemsize bytes) plus double-buffered
    output block. The (TM, 1) output block is lane-padded to 128 lanes in VMEM,
    so it costs 128*itemsize bytes per row. Keep 2*(x + out) under ~45% of the
    scoped VMEM limit (headroom for the weight row, f32 temporaries and Mosaic
    internal scratch). TM is a multiple of 8 (f32 sublane granularity) and is
    capped at ceil(M/2) so the grid has >= 2 steps (v7x megacore sharding).
    No hard row cap otherwise -- multi-MiB blocks are needed to approach the
    HBM roofline.
    """
    bytes_per_row = H * itemsize + 128 * itemsize   # x row + lane-padded out row
    per_buffer_budget = int(vmem_limit * 0.45) // 2  # double-buffered
    tm = per_buffer_budget // max(1, bytes_per_row)
    tm = max(8, (int(tm) // 8) * 8)
    # Guarantee >= 2 grid steps whenever M allows it.
    half = -(-M // 2)                  # ceil(M / 2)
    half = max(8, -(-half // 8) * 8)   # round up to multiple of 8
    tm = min(tm, half)
    return max(8, (tm // 8) * 8)


def task0_forward(hidden_seq, weight, bias):
    """Task0Module.forward: nn.Linear(hidden_size, 1) on [..., H].

    hidden_seq: [B, S, H]; weight: [1, H]; bias: [1]  ->  [B, S, 1]
    """
    B, S, H = hidden_seq.shape
    M = B * S
    dtype = hidden_seq.dtype
    itemsize = jnp.dtype(dtype).itemsize

    x2d = hidden_seq.reshape(M, H)          # view; no copy
    w_row = weight.reshape(1, H)
    b2d = bias.reshape(1, 1).astype(jnp.float32)

    vmem_limit = _vmem_limit_bytes()
    TM = _choose_tm(M, H, itemsize, vmem_limit)

    # No wrapper-side padding: Pallas handles the final partial block itself.
    grid = (pl.cdiv(M, TM),)

    out2d = pl.pallas_call(
        _linear_kernel,
        out_shape=jax.ShapeDtypeStruct((M, 1), dtype),
        grid_spec=pltpu.PrefetchScalarGridSpec(
            num_scalar_prefetch=0,
            grid=grid,
            in_specs=[
                pl.BlockSpec((TM, H), lambda i: (i, 0)),            # streamed x tiles
                pl.BlockSpec((1, H), lambda i: (0, 0)),             # resident weight row
                pl.BlockSpec(memory_space=pltpu.MemorySpace.SMEM),  # bias scalar
            ],
            out_specs=pl.BlockSpec((TM, 1), lambda i: (i, 0)),
        ),
        compiler_params=pltpu.CompilerParams(
            dimension_semantics=("parallel",),   # megacore sharding on v7x
            vmem_limit_bytes=vmem_limit,
        ),
    )(x2d, w_row, b2d)

    return out2d.reshape(B, S, 1)


if __name__ == "__main__":
    key = jax.random.PRNGKey(0)
    k_x, k_w, k_b = jax.random.split(key, 3)

    batch, seq, hidden = 2, 8, 32

    hidden_seq = jax.random.normal(k_x, (batch, seq, hidden), dtype=jnp.float32)

    # Deterministic parameter init (mimics nn.Linear uniform(-1/sqrt(H), 1/sqrt(H)))
    bound = 1.0 / (hidden ** 0.5)
    weight = jax.random.uniform(k_w, (1, hidden), minval=-bound, maxval=bound,
                                dtype=jnp.float32)
    bias = jax.random.uniform(k_b, (1,), minval=-bound, maxval=bound,
                              dtype=jnp.float32)

    out = task0_forward(hidden_seq, weight, bias)
    out = jax.block_until_ready(out)

    # Reference check in plain JAX (same math as PyTorch's Linear).
    ref = hidden_seq @ weight.T + bias
    assert out.shape == (batch, seq, 1)
    assert jnp.allclose(out, ref, atol=1e-5), "mismatch vs reference"

    print("KERNEL_OK")
</pallas_src>

<mosaic_0001>
module attributes {stable_mosaic.version = 11 : i64} {
  func.func @_linear_kernel(%arg0: i32, %arg1: memref<8x32xf32, #tpu.memory_space<vmem>>, %arg2: memref<1x32xf32, #tpu.memory_space<vmem>>, %arg3: memref<1x1xf32, #tpu.memory_space<smem>>, %arg4: memref<8x1xf32, #tpu.memory_space<vmem>>) attributes {dimension_semantics = [#tpu.dimension_semantics<parallel>], iteration_bounds = array<i64: 2>, scalar_prefetch = 0 : i64, scratch_operands = 0 : i64, tpu.core_type = #tpu.core_type<tc>, window_params = [{transform_indices = @transform_0, window_bounds = array<i64: 8, 32>}, {pipeline_mode = #tpu.pipeline_mode<synchronous>, transform_indices = @transform_1, window_bounds = array<i64: 1, 32>}, {transform_indices = @transform_2, window_bounds = array<i64: 1, 1>}, {transform_indices = @transform_3, window_bounds = array<i64: 8, 1>}]} {
    %c0 = arith.constant 0 : index
    %c0_0 = arith.constant 0 : index
    %0 = vector.load %arg1[%c0, %c0_0] : memref<8x32xf32, #tpu.memory_space<vmem>>, vector<8x32xf32>
    %c0_1 = arith.constant 0 : index
    %c0_2 = arith.constant 0 : index
    %1 = vector.load %arg2[%c0_1, %c0_2] : memref<1x32xf32, #tpu.memory_space<vmem>>, vector<1x32xf32>
    %2 = vector.broadcast %1 : vector<1x32xf32> to vector<8x32xf32>
    %3 = arith.mulf %0, %2 : vector<8x32xf32>
    %cst = arith.constant dense<0.000000e+00> : vector<8xf32>
    %4 = vector.multi_reduction <add>, %3, %cst [1] : vector<8x32xf32> to vector<8xf32>
    %5 = vector.shape_cast %4 : vector<8xf32> to vector<8x1xf32>
    %c0_3 = arith.constant 0 : index
    %c0_4 = arith.constant 0 : index
    %6 = memref.load %arg3[%c0_3, %c0_4] : memref<1x1xf32, #tpu.memory_space<smem>>
    %7 = vector.broadcast %6 : f32 to vector<8x1xf32>
    %8 = arith.addf %5, %7 : vector<8x1xf32>
    %c0_5 = arith.constant 0 : index
    %c0_6 = arith.constant 0 : index
    %9 = vector.load %arg4[%c0_5, %c0_6] : memref<8x1xf32, #tpu.memory_space<vmem>>, vector<8x1xf32>
    tpu.vector_store %arg4[%c0_5, %c0_6], %8 {strides = array<i32>} : memref<8x1xf32, #tpu.memory_space<vmem>>, vector<8x1xf32>,
    return
  }
  func.func @transform_0(%arg0: i32) -> (i32, i32) {
    %c0_i32 = arith.constant 0 : i32
    %c0_i32_0 = arith.constant 0 : i32
    return %arg0, %c0_i32 : i32, i32
  }
  func.func @transform_1(%arg0: i32) -> (i32, i32) {
    %c0_i32 = arith.constant 0 : i32
    %c0_i32_0 = arith.constant 0 : i32
    %c0_i32_1 = arith.constant 0 : i32
    return %c0_i32, %c0_i32_0 : i32, i32
  }
  func.func @transform_2(%arg0: i32) -> (i32, i32) {
    %c0_i32 = arith.constant 0 : i32
    %c0_i32_0 = arith.constant 0 : i32
    %c0_i32_1 = arith.constant 0 : i32
    return %c0_i32, %c0_i32_0 : i32, i32
  }
  func.func @transform_3(%arg0: i32) -> (i32, i32) {
    %c0_i32 = arith.constant 0 : i32
    %c0_i32_0 = arith.constant 0 : i32
    return %arg0, %c0_i32 : i32, i32
  }
}

</mosaic_0001>

<llo_original>
// kernel: tpu_custom_call.1
$region0: #{tpu_custom_call.1}
  #allocation0 [shape = 'u32[]', space=smem, size = 0x4, offset = 0x4, fixed_abs, tag = 'smem constant byte address 0x4 - core index']
  #allocation1 [shape = 'u32[144,128]{1,0:T(1,128)}', space=vmem, size = 0x12000, scoped, tag = 'internal scratch']
  #allocation2 [shape = 'f32[1,1]{1,0:T(1,128)S(6)}', space=smem, size = 0x200, scoped, tag = 'scoped memory for tpu_custom_call.1']
  %s0 = inlined_call_operand.hbm [shape: f32[16,32], index: 0, kind: input, shape index: {}]
  %s1 = inlined_call_operand.vmem [shape: f32[1,32], index: 1, kind: input, shape index: {}]
  %s2 = inlined_call_operand.<no memory space> [shape: f32[1,1], index: 2, kind: input, shape index: {}]
  %s3 = inlined_call_operand.vmem [shape: f32[16,1], index: 3, kind: output, shape index: {}]
  %s4 = sld [smem:[#allocation0]]
  $region49: #{tpu_custom_call.1} parent=0
    _
  %s6 = ssub.s32 1, %s4
  %s7 = scalar_select 0, %s6, %s4
  %8 = sst [smem:[#allocation2]] %s2
  $region1: #{tpu_custom_call.1} parent=0
    #allocation3 [shape = 'u8[8192]{0}', space=vmem, size = 0x2000, scoped, tag = 'input window, operand 0']
    #allocation4 [shape = 's32[2]{0}', space=sflag, size = 0x8, scoped, tag = 'scoped memory for tpu_custom_call.1']
    %9 = vsyncpa [#allocation4], 0
    %s10 = scalar_lea.sflag [#allocation4], 1
    %11 = vsyncpa %s10, 0
    loop: start=0, step=1, limit=4
    $region2: #{tpu_custom_call.1} parent=1 // loop_pre_header
      _
    $region3: #{tpu_custom_call.1} parent=1 // loop_header
      %s13 = sphi 0, %s17
      %p14 = scmp.ge.s32.totalorder %s13, 4
      %s23 = sphi 0, %s25
      %s26 = sphi 0, %s23
      %s27 = sphi 0, %s26
      %s43 = sphi 0, %s27
      %s47 = sphi 0, %s47
      %s49 = sphi 0, %s47
      %s50 = sphi 0, %s49
      %s64 = sphi 0, %s50
      %s68 = sphi 0, %s68
      %s70 = sphi 0, %s68
      %s71 = sphi 0, %s70
      %s85 = sphi 0, %s71
      %s91 = sphi 0, %s93
      %s94 = sphi 0, %s91
      %s95 = sphi 0, %s94
      %s111 = sphi 0, %s95
    $region4: #{tpu_custom_call.1} parent=1 // loop_header_branch
      %16 = sbr.rel (%p14) target = $region8
    $region5: #{tpu_custom_call.1} parent=1 // loop_body
      %s18 = ssub.s32 %s13, 1
      %s19 = ssub.s32 %s13, 2
      %s20 = sadd.s32 %s13, 1
      %s21 = ssub.s32 %s13, %s20
      %p22 = scmp.eq.s32.totalorder %s21, 0
      %s24 = sadd.s32 %s23, 1
      %s25 = scalar_select %p22, %s23, %s24
      %p28 = pneg %p22
      %p29 = scmp.eq.s32.totalorder %s13, 1
      %p30 = por %p28, %p29
      %p31 = scmp.ne.s32.totalorder %s23, %s26
      %p32 = scmp.eq.s32.totalorder %s13, 0
      %p33 = por %p31, %p32
      %p34 = scmp.ne.s32.totalorder %s23, %s26
      %p35 = scmp.eq.s32.totalorder %s18, 1
      %p36 = por %p34, %p35
      %p37 = scmp.ne.s32.totalorder %s26, %s27
      %p38 = scmp.eq.s32.totalorder %s18, 0
      %p39 = por %p37, %p38
      %p40 = scmp.ne.s32.totalorder %s26, %s27
      %p41 = scmp.eq.s32.totalorder %s19, 1
      %p42 = por %p40, %p41
      %p44 = scmp.ne.s32.totalorder %s27, %s43
      %p45 = scmp.eq.s32.totalorder %s19, 0
      %p46 = por %p44, %p45
      %s48 = sadd.s32 %s47, 1
      %p51 = scmp.eq.s32.totalorder %s13, 1
      %p52 = scmp.ne.s32.totalorder %s47, %s49
      %p53 = scmp.eq.s32.totalorder %s13, 0
      %p54 = por %p52, %p53
      %p55 = scmp.ne.s32.totalorder %s47, %s49
      %p56 = scmp.eq.s32.totalorder %s18, 1
      %p57 = por %p55, %p56
      %p58 = scmp.ne.s32.totalorder %s49, %s50
      %p59 = scmp.eq.s32.totalorder %s18, 0
      %p60 = por %p58, %p59
      %p61 = scmp.ne.s32.totalorder %s49, %s50
      %p62 = scmp.eq.s32.totalorder %s19, 1
      %p63 = por %p61, %p62
      %p65 = scmp.ne.s32.totalorder %s50, %s64
      %p66 = scmp.eq.s32.totalorder %s19, 0
      %p67 = por %p65, %p66
      %s69 = sadd.s32 %s68, 1
      %p72 = scmp.eq.s32.totalorder %s13, 1
      %p73 = scmp.ne.s32.totalorder %s68, %s70
      %p74 = scmp.eq.s32.totalorder %s13, 0
      %p75 = por %p73, %p74
      %p76 = scmp.ne.s32.totalorder %s68, %s70
      %p77 = scmp.eq.s32.totalorder %s18, 1
      %p78 = por %p76, %p77
      %p79 = scmp.ne.s32.totalorder %s70, %s71
      %p80 = scmp.eq.s32.totalorder %s18, 0
      %p81 = por %p79, %p80
      %p82 = scmp.ne.s32.totalorder %s70, %s71
      %p83 = scmp.eq.s32.totalorder %s19, 1
      %p84 = por %p82, %p83
      %p86 = scmp.ne.s32.totalorder %s71, %s85
      %p87 = scmp.eq.s32.totalorder %s19, 0
      %p88 = por %p86, %p87
      %s89 = ssub.s32 %s13, %s20
      %p90 = scmp.eq.s32.totalorder %s89, 0
      %s92 = sadd.s32 %s91, 1
      %s93 = scalar_select %p90, %s91, %s92
      %p96 = pneg %p90
      %p97 = scmp.eq.s32.totalorder %s13, 1
      %p98 = por %p96, %p97
      %p99 = scmp.ne.s32.totalorder %s91, %s94
      %p100 = scmp.eq.s32.totalorder %s13, 0
      %p101 = por %p99, %p100
      %p102 = scmp.ne.s32.totalorder %s91, %s94
      %p103 = scmp.eq.s32.totalorder %s18, 1
      %p104 = por %p102, %p103
      %p105 = scmp.ne.s32.totalorder %s94, %s95
      %p106 = scmp.eq.s32.totalorder %s18, 0
      %p107 = por %p105, %p106
      %p108 = scmp.ne.s32.totalorder %s94, %s95
      %p109 = scmp.eq.s32.totalorder %s19, 1
      %p110 = por %p108, %p109
      %p112 = scmp.ne.s32.totalorder %s95, %s111
      %p113 = scmp.eq.s32.totalorder %s19, 0
      %p114 = por %p112, %p113
      %p115 = scmp.le.s32.totalorder 1, %s13
      %p116 = scmp.lt.s32.totalorder %s13, 3
      %p117 = pnand %p115, %p116
      %p118 = pneg %p117
      // Predicated region
      $region9: #{tpu_custom_call.1} parent=5 // pred_check
        _
      $region10: #{tpu_custom_call.1} parent=5 // pred_check_branch
        %120 = sbr.rel (%p117) target = $region12
      $region11: #{tpu_custom_call.1} parent=5 // pred_region
        %s121 = ssub.s32 %s13, 1
        // Predicated region
        $region13: #{tpu_custom_call.1} parent=11 // pred_check
          %p122 = pneg %p60
        $region14: #{tpu_custom_call.1} parent=11 // pred_check_branch
          %124 = sbr.rel (%p122) target = $region16
        $region15: #{tpu_custom_call.1} parent=11 // pred_region
          _
        $region16: #{tpu_custom_call.1} parent=11 // pred_fallthru
          _
        // Predicated region
        $region17: #{tpu_custom_call.1} parent=11 // pred_check
          %p125 = pneg %p81
        $region18: #{tpu_custom_call.1} parent=11 // pred_check_branch
          %127 = sbr.rel (%p125) target = $region20
        $region19: #{tpu_custom_call.1} parent=11 // pred_region
          _
        $region20: #{tpu_custom_call.1} parent=11 // pred_fallthru
          _
      $region12: #{tpu_custom_call.1} parent=5 // pred_fallthru
        _
      %p128 = scmp.lt.s32.totalorder %s13, 2
      // Predicated region
      $region21: #{tpu_custom_call.1} parent=5 // pred_check
        %p129 = pneg %p128
      $region22: #{tpu_custom_call.1} parent=5 // pred_check_branch
        %131 = sbr.rel (%p129) target = $region24
      $region23: #{tpu_custom_call.1} parent=5 // pred_region
        // Predicated region
        $region25: #{tpu_custom_call.1} parent=23 // pred_check
          %p132 = pneg %p33
        $region26: #{tpu_custom_call.1} parent=23 // pred_check_branch
          %134 = sbr.rel (%p132) target = $region28
        $region27: #{tpu_custom_call.1} parent=23 // pred_region
          %s135 = sand.u32 %s23, 1
          %s136 = scalar_lea.sflag [#allocation4], %s135
          %s137 = sand.u32 %s23, 1
          %s138 = smul.addr %s137, 8
          %s139 = scalar_lea.vmem [#allocation3], %s138
          %s141 = ssub.s32 128, 128
          %142 = vsyncadd %s136, %s141
          %s143 = smul.addr %s13, 128
          %s144 = scalar_lea.hbm %s0, %s143
          %s146 = sshll.u32 %s139, 4
          %s147 = int_to_ptr.vmem [resolvable:$true] %s146
          %149 = dma.hbm_to_vmem [thread:$0]  %s144, 128, %s147, %s136
        $region28: #{tpu_custom_call.1} parent=23 // pred_fallthru
          _
      $region24: #{tpu_custom_call.1} parent=5 // pred_fallthru
        _
      %p150 = scmp.le.s32.totalorder 1, %s13
      %p151 = scmp.lt.s32.totalorder %s13, 3
      %p152 = pnand %p150, %p151
      %p153 = pneg %p152
      // Predicated region
      $region29: #{tpu_custom_call.1} parent=5 // pred_check
        _
      $region30: #{tpu_custom_call.1} parent=5 // pred_check_branch
        %155 = sbr.rel (%p152) target = $region32
      $region31: #{tpu_custom_call.1} parent=5 // pred_region
        %s156 = ssub.s32 %s13, 1
        %s157 = sand.u32 %s26, 1
        %s158 = scalar_lea.sflag [#allocation4], %s157
        %s159 = sand.u32 %s26, 1
        %s160 = smul.addr %s159, 8
        %s161 = scalar_lea.vmem [#allocation3], %s160
        // Predicated region
        $region33: #{tpu_custom_call.1} parent=31 // pred_check
          %p162 = pneg %p39
        $region34: #{tpu_custom_call.1} parent=31 // pred_check_branch
          %164 = sbr.rel (%p162) target = $region36
        $region35: #{tpu_custom_call.1} parent=31 // pred_region
          %165 = dma.done %s158, 128
        $region36: #{tpu_custom_call.1} parent=31 // pred_fallthru
          _
        %s166 = sand.u32 %s26, 1
        %s167 = scalar_lea.sflag [#allocation4], %s166
        %s168 = sand.u32 %s26, 1
        %s169 = smul.addr %s168, 8
        %s170 = scalar_lea.vmem [#allocation3], %s169
        %p171 = pneg %p39
        %p172 = pneg %p36
        %p173 = pneg %p60
        %p174 = pneg %p57
        %p175 = pneg %p81
        %p176 = pneg %p78
        %p177 = pneg %p107
        %p178 = pneg %p104
        %p179 = scmp.lt.s32.totalorder %s18, 1
        %s180 = scalar_select %p179, %s18, 1
        %s181 = smul.addr %s180, 8
        %s182 = scalar_lea.vmem %s3, %s181
        %p183 = scmp.lt.s32.totalorder %s18, 1
        %s184 = scalar_select %p183, %s18, 1
        %s185 = smul.addr %s184, 8
        %s186 = scalar_lea.vmem %s3, %s185
        %v187 = vld [vmem:[%s161] sm:$0xff]
        %v188 = vld [vmem:[%s1] sm:$0x1]
        %v190 = vlaneseq
        %v191 = vshrl.u32 %v190, 7
        %v192 = vsub.s32 0, %v191
        %v193 = vrot.slane %v188, %v192
        %v195 = vmul.f32 %v187, %v193
        %vm196 = vcmask 261120
        %v197 = vsel %vm196, %v195, 0.0
        %198 = vadd.xlane.f32.xlu0 %v197
        %v199 = vpop.xlane.xlu0 %198
        %s200 = sld [smem:[#allocation2]]
        %v201 = vstv %s200
        %v202 = vadd.f32 %v199, %v201
        %vm203 = vcmask 7168
        %204 = vst.msk [vmem:[%s186] sm:$0xff] %vm203, %v202
        %p205 = scmp.lt.s32.totalorder %s18, 1
        %s206 = scalar_select %p205, %s18, 1
        %s207 = smul.addr %s206, 8
        %s208 = scalar_lea.vmem %s3, %s207
        // Predicated region
        $region37: #{tpu_custom_call.1} parent=31 // pred_check
          %p209 = pneg %p104
        $region38: #{tpu_custom_call.1} parent=31 // pred_check_branch
          %211 = sbr.rel (%p209) target = $region40
        $region39: #{tpu_custom_call.1} parent=31 // pred_region
          _
        $region40: #{tpu_custom_call.1} parent=31 // pred_fallthru
          _
      $region32: #{tpu_custom_call.1} parent=5 // pred_fallthru
        _
      %p212 = scmp.le.s32.totalorder 2, %s13
      // Predicated region
      $region41: #{tpu_custom_call.1} parent=5 // pred_check
        %p213 = pneg %p212
      $region42: #{tpu_custom_call.1} parent=5 // pred_check_branch
        %215 = sbr.rel (%p213) target = $region44
      $region43: #{tpu_custom_call.1} parent=5 // pred_region
        %s216 = ssub.s32 %s13, 2
        // Predicated region
        $region45: #{tpu_custom_call.1} parent=43 // pred_check
          %p217 = pneg %p110
        $region46: #{tpu_custom_call.1} parent=43 // pred_check_branch
          %219 = sbr.rel (%p217) target = $region48
        $region47: #{tpu_custom_call.1} parent=43 // pred_region
          %p220 = scmp.lt.s32.totalorder %s19, 1
          %s221 = scalar_select %p220, %s19, 1
          %s222 = smul.addr %s221, 8
          %s223 = scalar_lea.vmem %s3, %s222
        $region48: #{tpu_custom_call.1} parent=43 // pred_fallthru
          _
      $region44: #{tpu_custom_call.1} parent=5 // pred_fallthru
        _
    $region6: #{tpu_custom_call.1} parent=1 // loop_footer
      %s17 = sadd.s32 1, %s13
    $region7: #{tpu_custom_call.1} parent=1 // loop_footer_branch
      %12 = sbr.rel target = $region3
    $region8: #{tpu_custom_call.1} parent=1 // loop_exit
      _
    %224 = vsyncpa [#allocation4], 1
    %s225 = scalar_lea.sflag [#allocation4], 1
    %226 = vsyncpa %s225, 1

</llo_original>
